<compile_context>
chip_gen: v7x
topology: tpu7x:2x2x1
jax: 0.10.0
libtpu: 0.0.40
codegen_flags: <defaults>
</compile_context>

<pallas_src>
import functools

import jax
import jax.numpy as jnp
import numpy as np
from jax.experimental import pallas as pl
from jax.experimental.pallas import tpu as pltpu

_EPS = 1e-5
_INV_SQRT2 = 0.7071067811865476


def _round_up(n, m):
    return ((n + m - 1) // m) * m


def _gelu_exact(x):
    # nn.GELU() default (approximate='none'): 0.5 * x * (1 + erf(x / sqrt(2)))
    return 0.5 * x * (1.0 + jax.lax.erf(x * _INV_SQRT2))


def _mixer_branch(v, vec_ref, mat_ref):
    """Mixer2dTriU on a (BB, D) block, D = time_steps*channels flattened to lanes.

    vec_ref : (8, D) rows = [ln1_g, ln1_b, ln2_g, ln2_b, btri, mlp_b1, mlp_b2, 0]
    mat_ref : (3, D, D)   = [kron(tril(wtri).T, I_C), kron(I_T, w1), kron(I_T, w2)]
    """
    inv_d = 1.0 / v.shape[1]

    g1 = vec_ref[0:1, :]
    bt1 = vec_ref[1:2, :]
    g2 = vec_ref[2:3, :]
    bt2 = vec_ref[3:4, :]
    btri = vec_ref[4:5, :]
    mb1 = vec_ref[5:6, :]
    mb2 = vec_ref[6:7, :]

    # LayerNorm over the whole per-sample (T, C) slab == the lane axis here.
    # Two-pass mean/variance for numerical stability (matches torch LayerNorm).
    m1 = jnp.sum(v, axis=1, keepdims=True) * inv_d
    c1 = v - m1
    var1 = jnp.sum(c1 * c1, axis=1, keepdims=True) * inv_d
    xn = c1 * jax.lax.rsqrt(var1 + _EPS) * g1 + bt1

    # TriU time mixer: one lane-dense MXU matmul (M = BB, K = N = D).
    z = jnp.dot(xn, mat_ref[0], preferred_element_type=jnp.float32) + btri

    # residual + LayerNorm 2 (two-pass).
    s = z + v
    m2 = jnp.sum(s, axis=1, keepdims=True) * inv_d
    c2 = s - m2
    var2 = jnp.sum(c2 * c2, axis=1, keepdims=True) * inv_d
    x2 = c2 * jax.lax.rsqrt(var2 + _EPS) * g2 + bt2

    # Channel MixerBlock: Linear(C->C) -> exact GELU -> Linear(C->C),
    # block-diagonal over time so it stays one big matmul per layer.
    h = _gelu_exact(jnp.dot(x2, mat_ref[1], preferred_element_type=jnp.float32) + mb1)
    yy = jnp.dot(h, mat_ref[2], preferred_element_type=jnp.float32) + mb2
    return x2 + yy


def fused_mult_time_kernel(x_ref, y_ref, vecm_ref, matm_ref, vecs_ref, mats_ref,
                           out_ref):
    """One batch block per grid step; writes the full concatenated output block."""
    x = x_ref[...]                                           # (BB, T*C)
    mix = _mixer_branch(x, vecm_ref, matm_ref)               # (BB, T*C)
    scl = _mixer_branch(y_ref[...], vecs_ref, mats_ref)      # (BB, S*C)
    # Single large, sublane-aligned store: [inputs, mix(inputs), scale_mix(y)].
    out_ref[...] = jnp.concatenate([x, mix, scl], axis=-1)


def pack_mixer_params(p, T, C):
    """Pack one Mixer2dTriU's parameters into 2 dense slabs (call ONCE at load time)."""
    D = T * C
    eye_c = jnp.eye(C, dtype=jnp.float32)
    eye_t = jnp.eye(T, dtype=jnp.float32)
    wtri = jnp.tril(p["wtri"])                      # enforce TriU semantics
    mats = jnp.stack([
        jnp.kron(wtri.T, eye_c),                    # time mix:    x @ mats[0]
        jnp.kron(eye_t, p["w1"]),                   # channel in:  x @ mats[1]
        jnp.kron(eye_t, p["w2"]),                   # channel out: x @ mats[2]
    ], axis=0)                                      # (3, D, D)
    vecs = jnp.stack([
        p["ln1_g"].reshape(D), p["ln1_b"].reshape(D),
        p["ln2_g"].reshape(D), p["ln2_b"].reshape(D),
        jnp.broadcast_to(p["btri"], (T, C)).reshape(D),
        jnp.broadcast_to(p["b1"].reshape(1, C), (T, C)).reshape(D),
        jnp.broadcast_to(p["b2"].reshape(1, C), (T, C)).reshape(D),
        jnp.zeros((D,), jnp.float32),
    ], axis=0)                                      # (8, D)
    return vecs, mats


@functools.partial(jax.jit, static_argnames=("block_b",))
def mult_time_2d_mixer_pallas(inputs, y, mix_packed, scale_packed, *, block_b=256):
    """MultTime2dMixer.forward: concat([inputs, mix(inputs), scale_mix(y)], axis=1)."""
    B, T, C = inputs.shape
    _, S, _ = y.shape
    D, E = T * C, S * C
    O = (2 * T + S) * C
    vec_m, mat_m = mix_packed
    vec_s, mat_s = scale_packed

    # Batch-block size: multiple of 8 (sublane-aligned), capped by block_b;
    # prefer >=2 grid steps when the batch allows it (v7x dual-TensorCore).
    bb = min(block_b, _round_up(B, 8))
    if B >= 16 and _round_up(B, bb) // bb < 2:
        bb = _round_up((B + 1) // 2, 8)
    b_pad = _round_up(B, bb)

    x_flat = inputs.reshape(B, D)       # contiguous reshape, no data movement
    y_flat = y.reshape(B, E)
    if b_pad != B:
        x_flat = jnp.pad(x_flat, ((0, b_pad - B), (0, 0)))
        y_flat = jnp.pad(y_flat, ((0, b_pad - B), (0, 0)))

    out_flat = pl.pallas_call(
        fused_mult_time_kernel,
        out_shape=jax.ShapeDtypeStruct((b_pad, O), jnp.float32),
        grid=(b_pad // bb,),
        in_specs=[
            pl.BlockSpec((bb, D), lambda b: (b, 0)),          # inputs block
            pl.BlockSpec((bb, E), lambda b: (b, 0)),          # y block
            pl.BlockSpec((8, D), lambda b: (0, 0)),           # mix vec slab
            pl.BlockSpec((3, D, D), lambda b: (0, 0, 0)),     # mix mat slab
            pl.BlockSpec((8, E), lambda b: (0, 0)),           # scale vec slab
            pl.BlockSpec((3, E, E), lambda b: (0, 0, 0)),     # scale mat slab
        ],
        out_specs=pl.BlockSpec((bb, O), lambda b: (b, 0)),
        compiler_params=pltpu.CompilerParams(
            dimension_semantics=("parallel",)),
    )(x_flat, y_flat, vec_m, mat_m, vec_s, mat_s)

    return out_flat[:B].reshape(B, 2 * T + S, C)


# ------------------------ pure-JAX reference (for checking) -------------------
def _mixer2d_triu_ref(x, p):
    def ln(v, g, b):
        m = jnp.mean(v, axis=(1, 2), keepdims=True)
        var = jnp.mean((v - m) ** 2, axis=(1, 2), keepdims=True)
        return (v - m) * jax.lax.rsqrt(var + _EPS) * g[None] + b[None]

    xn = ln(x, p["ln1_g"], p["ln1_b"])
    z = jnp.einsum("ts,bsc->btc", jnp.tril(p["wtri"]), xn) + p["btri"][None, :, :]
    x2 = ln(z + x, p["ln2_g"], p["ln2_b"])
    h = _gelu_exact(x2 @ p["w1"] + p["b1"][None])
    yy = h @ p["w2"] + p["b2"][None]
    return x2 + yy


def mult_time_2d_mixer_ref(inputs, y, mp, sp):
    return jnp.concatenate(
        [inputs, _mixer2d_triu_ref(inputs, mp), _mixer2d_triu_ref(y, sp)], axis=1)


# ------------------------ deterministic parameter init ------------------------
def init_mixer2d_params(key, T, C):
    ks = jax.random.split(key, 10)
    wtri = jnp.tril(jax.random.normal(ks[0], (T, T), jnp.float32) * (1.0 / np.sqrt(T)))
    return {
        "ln1_g": 1.0 + 0.1 * jax.random.normal(ks[1], (T, C), jnp.float32),
        "ln1_b": 0.1 * jax.random.normal(ks[2], (T, C), jnp.float32),
        "wtri": wtri,                                             # (T, T) lower-tri
        "btri": 0.1 * jax.random.normal(ks[3], (T, 1), jnp.float32),
        "ln2_g": 1.0 + 0.1 * jax.random.normal(ks[4], (T, C), jnp.float32),
        "ln2_b": 0.1 * jax.random.normal(ks[5], (T, C), jnp.float32),
        "w1": jax.random.normal(ks[6], (C, C), jnp.float32) * (1.0 / np.sqrt(C)),
        "b1": 0.1 * jax.random.normal(ks[7], (1, C), jnp.float32),
        "w2": jax.random.normal(ks[8], (C, C), jnp.float32) * (1.0 / np.sqrt(C)),
        "b2": 0.1 * jax.random.normal(ks[9], (1, C), jnp.float32),
    }


if __name__ == "__main__":
    B, T, C, SCALE = 2, 16, 4, 8

    key = jax.random.PRNGKey(0)
    k_in, k_y, k_mix, k_scale = jax.random.split(key, 4)

    inputs = jax.random.normal(k_in, (B, T, C), jnp.float32)
    y = jax.random.normal(k_y, (B, SCALE, C), jnp.float32)

    mix_params = init_mixer2d_params(k_mix, T, C)
    scale_params = init_mixer2d_params(k_scale, SCALE, C)

    # Pack parameters ONCE, outside the jitted forward (hoisted per review).
    mix_packed = pack_mixer_params(mix_params, T, C)
    scale_packed = pack_mixer_params(scale_params, SCALE, C)

    out = mult_time_2d_mixer_pallas(inputs, y, mix_packed, scale_packed)
    out = jax.block_until_ready(out)

    ref = mult_time_2d_mixer_ref(inputs, y, mix_params, scale_params)
    assert out.shape == (B, 2 * T + SCALE, C), out.shape
    np.testing.assert_allclose(np.asarray(out), np.asarray(ref), rtol=1e-4, atol=1e-4)

    print("KERNEL_OK")
</pallas_src>

<mosaic_0001>
module attributes {stable_mosaic.version = 11 : i64} {
  func.func @fused_mult_time_kernel(%arg0: i32, %arg1: memref<8x64xf32, #tpu.memory_space<vmem>>, %arg2: memref<8x32xf32, #tpu.memory_space<vmem>>, %arg3: memref<8x64xf32, #tpu.memory_space<vmem>>, %arg4: memref<3x64x64xf32, #tpu.memory_space<vmem>>, %arg5: memref<8x32xf32, #tpu.memory_space<vmem>>, %arg6: memref<3x32x32xf32, #tpu.memory_space<vmem>>, %arg7: memref<8x160xf32, #tpu.memory_space<vmem>>) attributes {dimension_semantics = [#tpu.dimension_semantics<parallel>], iteration_bounds = array<i64: 1>, scalar_prefetch = 0 : i64, scratch_operands = 0 : i64, tpu.core_type = #tpu.core_type<tc>, window_params = [{transform_indices = @transform_0, window_bounds = array<i64: 8, 64>}, {transform_indices = @transform_1, window_bounds = array<i64: 8, 32>}, {pipeline_mode = #tpu.pipeline_mode<synchronous>, transform_indices = @transform_2, window_bounds = array<i64: 8, 64>}, {pipeline_mode = #tpu.pipeline_mode<synchronous>, transform_indices = @transform_3, window_bounds = array<i64: 3, 64, 64>}, {pipeline_mode = #tpu.pipeline_mode<synchronous>, transform_indices = @transform_4, window_bounds = array<i64: 8, 32>}, {pipeline_mode = #tpu.pipeline_mode<synchronous>, transform_indices = @transform_5, window_bounds = array<i64: 3, 32, 32>}, {transform_indices = @transform_6, window_bounds = array<i64: 8, 160>}]} {
    %c0 = arith.constant 0 : index
    %c0_0 = arith.constant 0 : index
    %0 = vector.load %arg1[%c0, %c0_0] : memref<8x64xf32, #tpu.memory_space<vmem>>, vector<8x64xf32>
    %c0_1 = arith.constant 0 : index
    %c0_2 = arith.constant 0 : index
    %1 = vector.load %arg3[%c0_1, %c0_2] : memref<8x64xf32, #tpu.memory_space<vmem>>, vector<1x64xf32>
    %c1 = arith.constant 1 : index
    %c0_3 = arith.constant 0 : index
    %2 = vector.load %arg3[%c1, %c0_3] : memref<8x64xf32, #tpu.memory_space<vmem>>, vector<1x64xf32>
    %c2 = arith.constant 2 : index
    %c0_4 = arith.constant 0 : index
    %3 = vector.load %arg3[%c2, %c0_4] : memref<8x64xf32, #tpu.memory_space<vmem>>, vector<1x64xf32>
    %c3 = arith.constant 3 : index
    %c0_5 = arith.constant 0 : index
    %4 = vector.load %arg3[%c3, %c0_5] : memref<8x64xf32, #tpu.memory_space<vmem>>, vector<1x64xf32>
    %c4 = arith.constant 4 : index
    %c0_6 = arith.constant 0 : index
    %5 = vector.load %arg3[%c4, %c0_6] : memref<8x64xf32, #tpu.memory_space<vmem>>, vector<1x64xf32>
    %c5 = arith.constant 5 : index
    %c0_7 = arith.constant 0 : index
    %6 = vector.load %arg3[%c5, %c0_7] : memref<8x64xf32, #tpu.memory_space<vmem>>, vector<1x64xf32>
    %c6 = arith.constant 6 : index
    %c0_8 = arith.constant 0 : index
    %7 = vector.load %arg3[%c6, %c0_8] : memref<8x64xf32, #tpu.memory_space<vmem>>, vector<1x64xf32>
    %cst = arith.constant dense<0.000000e+00> : vector<8xf32>
    %8 = vector.multi_reduction <add>, %0, %cst [1] : vector<8x64xf32> to vector<8xf32>
    %9 = vector.shape_cast %8 : vector<8xf32> to vector<8x1xf32>
    %cst_9 = arith.constant 1.562500e-02 : f32
    %10 = vector.broadcast %cst_9 : f32 to vector<8x1xf32>
    %11 = arith.mulf %9, %10 : vector<8x1xf32>
    %12 = vector.broadcast %11 : vector<8x1xf32> to vector<8x64xf32>
    %13 = arith.subf %0, %12 : vector<8x64xf32>
    %14 = arith.mulf %13, %13 : vector<8x64xf32>
    %cst_10 = arith.constant dense<0.000000e+00> : vector<8xf32>
    %15 = vector.multi_reduction <add>, %14, %cst_10 [1] : vector<8x64xf32> to vector<8xf32>
    %16 = vector.shape_cast %15 : vector<8xf32> to vector<8x1xf32>
    %cst_11 = arith.constant 1.562500e-02 : f32
    %17 = vector.broadcast %cst_11 : f32 to vector<8x1xf32>
    %18 = arith.mulf %16, %17 : vector<8x1xf32>
    %cst_12 = arith.constant 9.99999974E-6 : f32
    %19 = vector.broadcast %cst_12 : f32 to vector<8x1xf32>
    %20 = arith.addf %18, %19 : vector<8x1xf32>
    %21 = math.rsqrt %20 : vector<8x1xf32>
    %22 = vector.broadcast %21 : vector<8x1xf32> to vector<8x64xf32>
    %23 = arith.mulf %13, %22 : vector<8x64xf32>
    %24 = vector.broadcast %1 : vector<1x64xf32> to vector<8x64xf32>
    %25 = arith.mulf %23, %24 : vector<8x64xf32>
    %26 = vector.broadcast %2 : vector<1x64xf32> to vector<8x64xf32>
    %27 = arith.addf %25, %26 : vector<8x64xf32>
    %c0_13 = arith.constant 0 : index
    %c0_14 = arith.constant 0 : index
    %c0_15 = arith.constant 0 : index
    %28 = vector.load %arg4[%c0_13, %c0_14, %c0_15] : memref<3x64x64xf32, #tpu.memory_space<vmem>>, vector<1x64x64xf32>
    %29 = vector.shape_cast %28 : vector<1x64x64xf32> to vector<64x64xf32>
    %cst_16 = arith.constant dense<0.000000e+00> : vector<8x64xf32>
    %30 = tpu.matmul %27, %29, %cst_16 {dimension_numbers = #tpu.dot_dimension_numbers<[1], [0], [0], [1], [0, 0, 1, 1], [], []>} : vector<8x64xf32>, vector<64x64xf32>, vector<8x64xf32> -> vector<8x64xf32>
    %31 = vector.broadcast %5 : vector<1x64xf32> to vector<8x64xf32>
    %32 = arith.addf %30, %31 : vector<8x64xf32>
    %33 = arith.addf %32, %0 : vector<8x64xf32>
    %cst_17 = arith.constant dense<0.000000e+00> : vector<8xf32>
    %34 = vector.multi_reduction <add>, %33, %cst_17 [1] : vector<8x64xf32> to vector<8xf32>
    %35 = vector.shape_cast %34 : vector<8xf32> to vector<8x1xf32>
    %cst_18 = arith.constant 1.562500e-02 : f32
    %36 = vector.broadcast %cst_18 : f32 to vector<8x1xf32>
    %37 = arith.mulf %35, %36 : vector<8x1xf32>
    %38 = vector.broadcast %37 : vector<8x1xf32> to vector<8x64xf32>
    %39 = arith.subf %33, %38 : vector<8x64xf32>
    %40 = arith.mulf %39, %39 : vector<8x64xf32>
    %cst_19 = arith.constant dense<0.000000e+00> : vector<8xf32>
    %41 = vector.multi_reduction <add>, %40, %cst_19 [1] : vector<8x64xf32> to vector<8xf32>
    %42 = vector.shape_cast %41 : vector<8xf32> to vector<8x1xf32>
    %cst_20 = arith.constant 1.562500e-02 : f32
    %43 = vector.broadcast %cst_20 : f32 to vector<8x1xf32>
    %44 = arith.mulf %42, %43 : vector<8x1xf32>
    %cst_21 = arith.constant 9.99999974E-6 : f32
    %45 = vector.broadcast %cst_21 : f32 to vector<8x1xf32>
    %46 = arith.addf %44, %45 : vector<8x1xf32>
    %47 = math.rsqrt %46 : vector<8x1xf32>
    %48 = vector.broadcast %47 : vector<8x1xf32> to vector<8x64xf32>
    %49 = arith.mulf %39, %48 : vector<8x64xf32>
    %50 = vector.broadcast %3 : vector<1x64xf32> to vector<8x64xf32>
    %51 = arith.mulf %49, %50 : vector<8x64xf32>
    %52 = vector.broadcast %4 : vector<1x64xf32> to vector<8x64xf32>
    %53 = arith.addf %51, %52 : vector<8x64xf32>
    %c1_22 = arith.constant 1 : index
    %c0_23 = arith.constant 0 : index
    %c0_24 = arith.constant 0 : index
    %54 = vector.load %arg4[%c1_22, %c0_23, %c0_24] : memref<3x64x64xf32, #tpu.memory_space<vmem>>, vector<1x64x64xf32>
    %55 = vector.shape_cast %54 : vector<1x64x64xf32> to vector<64x64xf32>
    %cst_25 = arith.constant dense<0.000000e+00> : vector<8x64xf32>
    %56 = tpu.matmul %53, %55, %cst_25 {dimension_numbers = #tpu.dot_dimension_numbers<[1], [0], [0], [1], [0, 0, 1, 1], [], []>} : vector<8x64xf32>, vector<64x64xf32>, vector<8x64xf32> -> vector<8x64xf32>
    %57 = vector.broadcast %6 : vector<1x64xf32> to vector<8x64xf32>
    %58 = arith.addf %56, %57 : vector<8x64xf32>
    %cst_26 = arith.constant 5.000000e-01 : f32
    %59 = vector.broadcast %cst_26 : f32 to vector<8x64xf32>
    %60 = arith.mulf %59, %58 : vector<8x64xf32>
    %cst_27 = arith.constant 0.707106769 : f32
    %61 = vector.broadcast %cst_27 : f32 to vector<8x64xf32>
    %62 = arith.mulf %58, %61 : vector<8x64xf32>
    %63 = math.erf %62 : vector<8x64xf32>
    %cst_28 = arith.constant 1.000000e+00 : f32
    %64 = vector.broadcast %cst_28 : f32 to vector<8x64xf32>
    %65 = arith.addf %64, %63 : vector<8x64xf32>
    %66 = arith.mulf %60, %65 : vector<8x64xf32>
    %c2_29 = arith.constant 2 : index
    %c0_30 = arith.constant 0 : index
    %c0_31 = arith.constant 0 : index
    %67 = vector.load %arg4[%c2_29, %c0_30, %c0_31] : memref<3x64x64xf32, #tpu.memory_space<vmem>>, vector<1x64x64xf32>
    %68 = vector.shape_cast %67 : vector<1x64x64xf32> to vector<64x64xf32>
    %cst_32 = arith.constant dense<0.000000e+00> : vector<8x64xf32>
    %69 = tpu.matmul %66, %68, %cst_32 {dimension_numbers = #tpu.dot_dimension_numbers<[1], [0], [0], [1], [0, 0, 1, 1], [], []>} : vector<8x64xf32>, vector<64x64xf32>, vector<8x64xf32> -> vector<8x64xf32>
    %70 = vector.broadcast %7 : vector<1x64xf32> to vector<8x64xf32>
    %71 = arith.addf %69, %70 : vector<8x64xf32>
    %72 = arith.addf %53, %71 : vector<8x64xf32>
    %c0_33 = arith.constant 0 : index
    %c0_34 = arith.constant 0 : index
    %73 = vector.load %arg2[%c0_33, %c0_34] : memref<8x32xf32, #tpu.memory_space<vmem>>, vector<8x32xf32>
    %c0_35 = arith.constant 0 : index
    %c0_36 = arith.constant 0 : index
    %74 = vector.load %arg5[%c0_35, %c0_36] : memref<8x32xf32, #tpu.memory_space<vmem>>, vector<1x32xf32>
    %c1_37 = arith.constant 1 : index
    %c0_38 = arith.constant 0 : index
    %75 = vector.load %arg5[%c1_37, %c0_38] : memref<8x32xf32, #tpu.memory_space<vmem>>, vector<1x32xf32>
    %c2_39 = arith.constant 2 : index
    %c0_40 = arith.constant 0 : index
    %76 = vector.load %arg5[%c2_39, %c0_40] : memref<8x32xf32, #tpu.memory_space<vmem>>, vector<1x32xf32>
    %c3_41 = arith.constant 3 : index
    %c0_42 = arith.constant 0 : index
    %77 = vector.load %arg5[%c3_41, %c0_42] : memref<8x32xf32, #tpu.memory_space<vmem>>, vector<1x32xf32>
    %c4_43 = arith.constant 4 : index
    %c0_44 = arith.constant 0 : index
    %78 = vector.load %arg5[%c4_43, %c0_44] : memref<8x32xf32, #tpu.memory_space<vmem>>, vector<1x32xf32>
    %c5_45 = arith.constant 5 : index
    %c0_46 = arith.constant 0 : index
    %79 = vector.load %arg5[%c5_45, %c0_46] : memref<8x32xf32, #tpu.memory_space<vmem>>, vector<1x32xf32>
    %c6_47 = arith.constant 6 : index
    %c0_48 = arith.constant 0 : index
    %80 = vector.load %arg5[%c6_47, %c0_48] : memref<8x32xf32, #tpu.memory_space<vmem>>, vector<1x32xf32>
    %cst_49 = arith.constant dense<0.000000e+00> : vector<8xf32>
    %81 = vector.multi_reduction <add>, %73, %cst_49 [1] : vector<8x32xf32> to vector<8xf32>
    %82 = vector.shape_cast %81 : vector<8xf32> to vector<8x1xf32>
    %cst_50 = arith.constant 3.125000e-02 : f32
    %83 = vector.broadcast %cst_50 : f32 to vector<8x1xf32>
    %84 = arith.mulf %82, %83 : vector<8x1xf32>
    %85 = vector.broadcast %84 : vector<8x1xf32> to vector<8x32xf32>
    %86 = arith.subf %73, %85 : vector<8x32xf32>
    %87 = arith.mulf %86, %86 : vector<8x32xf32>
    %cst_51 = arith.constant dense<0.000000e+00> : vector<8xf32>
    %88 = vector.multi_reduction <add>, %87, %cst_51 [1] : vector<8x32xf32> to vector<8xf32>
    %89 = vector.shape_cast %88 : vector<8xf32> to vector<8x1xf32>
    %cst_52 = arith.constant 3.125000e-02 : f32
    %90 = vector.broadcast %cst_52 : f32 to vector<8x1xf32>
    %91 = arith.mulf %89, %90 : vector<8x1xf32>
    %cst_53 = arith.constant 9.99999974E-6 : f32
    %92 = vector.broadcast %cst_53 : f32 to vector<8x1xf32>
    %93 = arith.addf %91, %92 : vector<8x1xf32>
    %94 = math.rsqrt %93 : vector<8x1xf32>
    %95 = vector.broadcast %94 : vector<8x1xf32> to vector<8x32xf32>
    %96 = arith.mulf %86, %95 : vector<8x32xf32>
    %97 = vector.broadcast %74 : vector<1x32xf32> to vector<8x32xf32>
    %98 = arith.mulf %96, %97 : vector<8x32xf32>
    %99 = vector.broadcast %75 : vector<1x32xf32> to vector<8x32xf32>
    %100 = arith.addf %98, %99 : vector<8x32xf32>
    %c0_54 = arith.constant 0 : index
    %c0_55 = arith.constant 0 : index
    %c0_56 = arith.constant 0 : index
    %101 = vector.load %arg6[%c0_54, %c0_55, %c0_56] : memref<3x32x32xf32, #tpu.memory_space<vmem>>, vector<1x32x32xf32>
    %102 = vector.shape_cast %101 : vector<1x32x32xf32> to vector<32x32xf32>
    %cst_57 = arith.constant dense<0.000000e+00> : vector<8x32xf32>
    %103 = tpu.matmul %100, %102, %cst_57 {dimension_numbers = #tpu.dot_dimension_numbers<[1], [0], [0], [1], [0, 0, 1, 1], [], []>} : vector<8x32xf32>, vector<32x32xf32>, vector<8x32xf32> -> vector<8x32xf32>
    %104 = vector.broadcast %78 : vector<1x32xf32> to vector<8x32xf32>
    %105 = arith.addf %103, %104 : vector<8x32xf32>
    %106 = arith.addf %105, %73 : vector<8x32xf32>
    %cst_58 = arith.constant dense<0.000000e+00> : vector<8xf32>
    %107 = vector.multi_reduction <add>, %106, %cst_58 [1] : vector<8x32xf32> to vector<8xf32>
    %108 = vector.shape_cast %107 : vector<8xf32> to vector<8x1xf32>
    %cst_59 = arith.constant 3.125000e-02 : f32
    %109 = vector.broadcast %cst_59 : f32 to vector<8x1xf32>
    %110 = arith.mulf %108, %109 : vector<8x1xf32>
    %111 = vector.broadcast %110 : vector<8x1xf32> to vector<8x32xf32>
    %112 = arith.subf %106, %111 : vector<8x32xf32>
    %113 = arith.mulf %112, %112 : vector<8x32xf32>
    %cst_60 = arith.constant dense<0.000000e+00> : vector<8xf32>
    %114 = vector.multi_reduction <add>, %113, %cst_60 [1] : vector<8x32xf32> to vector<8xf32>
    %115 = vector.shape_cast %114 : vector<8xf32> to vector<8x1xf32>
    %cst_61 = arith.constant 3.125000e-02 : f32
    %116 = vector.broadcast %cst_61 : f32 to vector<8x1xf32>
    %117 = arith.mulf %115, %116 : vector<8x1xf32>
    %cst_62 = arith.constant 9.99999974E-6 : f32
    %118 = vector.broadcast %cst_62 : f32 to vector<8x1xf32>
    %119 = arith.addf %117, %118 : vector<8x1xf32>
    %120 = math.rsqrt %119 : vector<8x1xf32>
    %121 = vector.broadcast %120 : vector<8x1xf32> to vector<8x32xf32>
    %122 = arith.mulf %112, %121 : vector<8x32xf32>
    %123 = vector.broadcast %76 : vector<1x32xf32> to vector<8x32xf32>
    %124 = arith.mulf %122, %123 : vector<8x32xf32>
    %125 = vector.broadcast %77 : vector<1x32xf32> to vector<8x32xf32>
    %126 = arith.addf %124, %125 : vector<8x32xf32>
    %c1_63 = arith.constant 1 : index
    %c0_64 = arith.constant 0 : index
    %c0_65 = arith.constant 0 : index
    %127 = vector.load %arg6[%c1_63, %c0_64, %c0_65] : memref<3x32x32xf32, #tpu.memory_space<vmem>>, vector<1x32x32xf32>
    %128 = vector.shape_cast %127 : vector<1x32x32xf32> to vector<32x32xf32>
    %cst_66 = arith.constant dense<0.000000e+00> : vector<8x32xf32>
    %129 = tpu.matmul %126, %128, %cst_66 {dimension_numbers = #tpu.dot_dimension_numbers<[1], [0], [0], [1], [0, 0, 1, 1], [], []>} : vector<8x32xf32>, vector<32x32xf32>, vector<8x32xf32> -> vector<8x32xf32>
    %130 = vector.broadcast %79 : vector<1x32xf32> to vector<8x32xf32>
    %131 = arith.addf %129, %130 : vector<8x32xf32>
    %cst_67 = arith.constant 5.000000e-01 : f32
    %132 = vector.broadcast %cst_67 : f32 to vector<8x32xf32>
    %133 = arith.mulf %132, %131 : vector<8x32xf32>
    %cst_68 = arith.constant 0.707106769 : f32
    %134 = vector.broadcast %cst_68 : f32 to vector<8x32xf32>
    %135 = arith.mulf %131, %134 : vector<8x32xf32>
    %136 = math.erf %135 : vector<8x32xf32>
    %cst_69 = arith.constant 1.000000e+00 : f32
    %137 = vector.broadcast %cst_69 : f32 to vector<8x32xf32>
    %138 = arith.addf %137, %136 : vector<8x32xf32>
    %139 = arith.mulf %133, %138 : vector<8x32xf32>
    %c2_70 = arith.constant 2 : index
    %c0_71 = arith.constant 0 : index
    %c0_72 = arith.constant 0 : index
    %140 = vector.load %arg6[%c2_70, %c0_71, %c0_72] : memref<3x32x32xf32, #tpu.memory_space<vmem>>, vector<1x32x32xf32>
    %141 = vector.shape_cast %140 : vector<1x32x32xf32> to vector<32x32xf32>
    %cst_73 = arith.constant dense<0.000000e+00> : vector<8x32xf32>
    %142 = tpu.matmul %139, %141, %cst_73 {dimension_numbers = #tpu.dot_dimension_numbers<[1], [0], [0], [1], [0, 0, 1, 1], [], []>} : vector<8x32xf32>, vector<32x32xf32>, vector<8x32xf32> -> vector<8x32xf32>
    %143 = vector.broadcast %80 : vector<1x32xf32> to vector<8x32xf32>
    %144 = arith.addf %142, %143 : vector<8x32xf32>
    %145 = arith.addf %126, %144 : vector<8x32xf32>
    %146 = tpu.concatenate %0, %72, %145 in 1 : vector<8x64xf32>, vector<8x64xf32>, vector<8x32xf32> -> vector<8x160xf32>
    %c0_74 = arith.constant 0 : index
    %c0_75 = arith.constant 0 : index
    %147 = vector.load %arg7[%c0_74, %c0_75] : memref<8x160xf32, #tpu.memory_space<vmem>>, vector<8x160xf32>
    tpu.vector_store %arg7[%c0_74, %c0_75], %146 {strides = array<i32>} : memref<8x160xf32, #tpu.memory_space<vmem>>, vector<8x160xf32>,
    return
  }
  func.func @transform_0(%arg0: i32) -> (i32, i32) {
    %c0_i32 = arith.constant 0 : i32
    %c0_i32_0 = arith.constant 0 : i32
    return %arg0, %c0_i32 : i32, i32
  }
  func.func @transform_1(%arg0: i32) -> (i32, i32) {
    %c0_i32 = arith.constant 0 : i32
    %c0_i32_0 = arith.constant 0 : i32
    return %arg0, %c0_i32 : i32, i32
  }
  func.func @transform_2(%arg0: i32) -> (i32, i32) {
    %c0_i32 = arith.constant 0 : i32
    %c0_i32_0 = arith.constant 0 : i32
    %c0_i32_1 = arith.constant 0 : i32
    return %c0_i32, %c0_i32_0 : i32, i32
  }
  func.func @transform_3(%arg0: i32) -> (i32, i32, i32) {
    %c0_i32 = arith.constant 0 : i32
    %c0_i32_0 = arith.constant 0 : i32
    %c0_i32_1 = arith.constant 0 : i32
    %c0_i32_2 = arith.constant 0 : i32
    return %c0_i32, %c0_i32_0, %c0_i32_1 : i32, i32, i32
  }
  func.func @transform_4(%arg0: i32) -> (i32, i32) {
    %c0_i32 = arith.constant 0 : i32
    %c0_i32_0 = arith.constant 0 : i32
    %c0_i32_1 = arith.constant 0 : i32
    return %c0_i32, %c0_i32_0 : i32, i32
  }
  func.func @transform_5(%arg0: i32) -> (i32, i32, i32) {
    %c0_i32 = arith.constant 0 : i32
    %c0_i32_0 = arith.constant 0 : i32
    %c0_i32_1 = arith.constant 0 : i32
    %c0_i32_2 = arith.constant 0 : i32
    return %c0_i32, %c0_i32_0, %c0_i32_1 : i32, i32, i32
  }
  func.func @transform_6(%arg0: i32) -> (i32, i32) {
    %c0_i32 = arith.constant 0 : i32
    %c0_i32_0 = arith.constant 0 : i32
    return %arg0, %c0_i32 : i32, i32
  }
}

</mosaic_0001>

<llo_original>
// kernel: mult_time_2d_mixer_pallas.1
$region0: #{mult_time_2d_mixer_pallas.1}
  #allocation0 [shape = 'u32[]', space=smem, size = 0x4, offset = 0x4, fixed_abs, tag = 'smem constant byte address 0x4 - core index']
  #allocation1 [shape = 'u32[144,128]{1,0:T(1,128)}', space=vmem, size = 0x12000, scoped, tag = 'internal scratch']
  %s0 = inlined_call_operand.vmem [shape: f32[8,64], index: 0, kind: input, shape index: {}]
  %s1 = inlined_call_operand.vmem [shape: f32[8,32], index: 1, kind: input, shape index: {}]
  %s2 = inlined_call_operand.vmem [shape: f32[8,64], index: 2, kind: input, shape index: {}]
  %s3 = inlined_call_operand.hbm [shape: f32[3,64,64], index: 3, kind: input, shape index: {}]
  %s4 = inlined_call_operand.vmem [shape: f32[8,32], index: 4, kind: input, shape index: {}]
  %s5 = inlined_call_operand.vmem [shape: f32[3,32,32], index: 5, kind: input, shape index: {}]
  %s6 = inlined_call_operand.vmem [shape: f32[8,160], index: 6, kind: output, shape index: {}]
  %s7 = sld [smem:[#allocation0]]
  $region38: #{mult_time_2d_mixer_pallas.1} parent=0
    _
  %s9 = ssub.s32 1, %s7
  %s10 = scalar_select 0, %s9, %s7
  $region1: #{mult_time_2d_mixer_pallas.1} parent=0
    #allocation2 [shape = 'u8[98304]{0}', space=vmem, size = 0x18000, scoped, tag = 'input window, operand 3, single buffered']
    #allocation3 [shape = 's32[1]{0}', space=sflag, size = 0x4, scoped, tag = 'scoped memory for mult_time_2d_mixer_pallas.1']
    %11 = vsyncpa [#allocation3], 0
    // Predicated region
    $region2: #{mult_time_2d_mixer_pallas.1} parent=1 // pred_check
      _
    $region3: #{mult_time_2d_mixer_pallas.1} parent=1 // pred_check_branch
      %13 = sbr.rel (0) target = $region5
    $region4: #{mult_time_2d_mixer_pallas.1} parent=1 // pred_region
      _
    $region5: #{mult_time_2d_mixer_pallas.1} parent=1 // pred_fallthru
      _
    // Predicated region
    $region6: #{mult_time_2d_mixer_pallas.1} parent=1 // pred_check
      _
    $region7: #{mult_time_2d_mixer_pallas.1} parent=1 // pred_check_branch
      %15 = sbr.rel (0) target = $region9
    $region8: #{mult_time_2d_mixer_pallas.1} parent=1 // pred_region
      _
    $region9: #{mult_time_2d_mixer_pallas.1} parent=1 // pred_fallthru
      _
    // Predicated region
    $region10: #{mult_time_2d_mixer_pallas.1} parent=1 // pred_check
      _
    $region11: #{mult_time_2d_mixer_pallas.1} parent=1 // pred_check_branch
      %17 = sbr.rel (0) target = $region13
    $region12: #{mult_time_2d_mixer_pallas.1} parent=1 // pred_region
      _
    $region13: #{mult_time_2d_mixer_pallas.1} parent=1 // pred_fallthru
      _
    // Predicated region
    $region14: #{mult_time_2d_mixer_pallas.1} parent=1 // pred_check
      _
    $region15: #{mult_time_2d_mixer_pallas.1} parent=1 // pred_check_branch
      %19 = sbr.rel (0) target = $region17
    $region16: #{mult_time_2d_mixer_pallas.1} parent=1 // pred_region
      %s21 = ssub.s32 3072, 3072
      %22 = vsyncadd [#allocation3], %s21
      %s23 = sshll.u32 [#allocation2], 4
      %s24 = int_to_ptr.vmem [resolvable:$true] %s23
      %29 = dma.hbm_to_vmem [thread:$0]  %s3, 3072, %s24, [#allocation3], 128, 128, 8
    $region17: #{mult_time_2d_mixer_pallas.1} parent=1 // pred_fallthru
      _
    // Predicated region
    $region18: #{mult_time_2d_mixer_pallas.1} parent=1 // pred_check
      _
    $region19: #{mult_time_2d_mixer_pallas.1} parent=1 // pred_check_branch
      %31 = sbr.rel (0) target = $region21
    $region20: #{mult_time_2d_mixer_pallas.1} parent=1 // pred_region
      _
    $region21: #{mult_time_2d_mixer_pallas.1} parent=1 // pred_fallthru
      _
    // Predicated region
    $region22: #{mult_time_2d_mixer_pallas.1} parent=1 // pred_check
      _
    $region23: #{mult_time_2d_mixer_pallas.1} parent=1 // pred_check_branch
      %33 = sbr.rel (0) target = $region25
    $region24: #{mult_time_2d_mixer_pallas.1} parent=1 // pred_region
      _
    $region25: #{mult_time_2d_mixer_pallas.1} parent=1 // pred_fallthru
      _
    // Predicated region
    $region26: #{mult_time_2d_mixer_pallas.1} parent=1 // pred_check
      _
    $region27: #{mult_time_2d_mixer_pallas.1} parent=1 // pred_check_branch
      %35 = sbr.rel (0) target = $region29
    $region28: #{mult_time_2d_mixer_pallas.1} parent=1 // pred_region
      %36 = dma.done [#allocation3], 3072
    $region29: #{mult_time_2d_mixer_pallas.1} parent=1 // pred_fallthru
      _
    %v37 = vld [vmem:[%s0] sm:$0xff]
    %v38 = vld [vmem:[%s2] sm:$0x1]
    %v39 = vld [vmem:[%s2 + $0x1] sm:$0x1]
    %v40 = vld [vmem:[%s2 + $0x2] sm:$0x1]
    %v41 = vld [vmem:[%s2 + $0x3] sm:$0x1]
    %v42 = vld [vmem:[%s2 + $0x4] sm:$0x1]
    %v43 = vld [vmem:[%s2 + $0x5] sm:$0x1]
    %v44 = vld [vmem:[%s2 + $0x6] sm:$0x1]
    %vm45 = vcmask 523264
    %v46 = vsel %vm45, %v37, 0.0
    %47 = vadd.xlane.f32.xlu0 %v46
    %v48 = vpop.xlane.xlu0 %47
    %v49 = vmul.f32 %v48, 0.015625
    %v50 = vsub.f32 %v37, %v49
    %v51 = vmul.f32 %v50, %v50
    %v52 = vsel %vm45, %v51, 0.0
    %53 = vadd.xlane.f32.xlu0 %v52
    %v54 = vpop.xlane.xlu0 %53
    %v55 = vmul.f32 %v54, 0.015625
    %v56 = vadd.f32 %v55, 1e-05
    %v57 = vrsqrt.pop %v56
    %v58 = vmul.f32 %v50, %v57
    %v59 = vlaneseq
    %v60 = vshrl.u32 %v59, 7
    %v61 = vsub.s32 0, %v60
    %v62 = vrot.slane %v38, %v61
    %v63 = vmul.f32 %v58, %v62
    %v64 = vlaneseq
    %v65 = vshrl.u32 %v64, 7
    %v66 = vsub.s32 0, %v65
    %v67 = vrot.slane %v39, %v66
    %v68 = vadd.f32 %v63, %v67
    %v69 = vld [vmem:[#allocation2] sm:$0xff]
    %v70 = vld [vmem:[#allocation2 + $0x8] sm:$0xff]
    %v71 = vld [vmem:[#allocation2 + $0x10] sm:$0xff]
    %v72 = vld [vmem:[#allocation2 + $0x18] sm:$0xff]
    %v73 = vld [vmem:[#allocation2 + $0x20] sm:$0xff]
    %v74 = vld [vmem:[#allocation2 + $0x28] sm:$0xff]
    %v75 = vld [vmem:[#allocation2 + $0x30] sm:$0xff]
    %v76 = vld [vmem:[#allocation2 + $0x38] sm:$0xff]
    %v77 = vlaneseq
    %v78 = vshrl.u32 %v77, 7
    %v79 = vsub.s32 0, %v78
    %v80 = vrot.slane %v42, %v79
    %v82 = vsel %vm45, %v68, 0
    %84 = vmatprep.subr.mxu0 0.0
    %85 = vmatpush1.msra.mxu0 %v69
    %86 = vmatprep.subr.mxu0 0.0
    %87 = vmatpush1.msra.mxu0 %v70
    %88 = vmatprep.subr.mxu0 0.0
    %89 = vmatpush1.msra.mxu0 %v71
    %90 = vmatprep.subr.mxu0 0.0
    %91 = vmatpush1.msra.mxu0 %v72
    %92 = vmatprep.subr.mxu0 0.0
    %93 = vmatpush1.msra.mxu0 %v73
    %94 = vmatprep.subr.mxu0 0.0
    %95 = vmatpush1.msra.mxu0 %v74
    %96 = vmatprep.subr.mxu0 0.0
    %97 = vmatpush1.msra.mxu0 %v75
    %98 = vmatprep.subr.mxu0 0.0
    %99 = vmatpush1.msra.mxu0 %v76
    %100 = vmatprep.subr.mxu0 0.0
    %101 = vmatpush1.msra.mxu0 0.0
    %102 = vmatprep.subr.mxu0 0.0
    %103 = vmatpush1.msra.mxu0 0.0
    %104 = vmatprep.subr.mxu0 0.0
    %105 = vmatpush1.msra.mxu0 0.0
    %106 = vmatprep.subr.mxu0 0.0
    %107 = vmatpush1.msra.mxu0 0.0
    %108 = vmatprep.subr.mxu0 0.0
    %109 = vmatpush1.msra.mxu0 0.0
    %110 = vmatprep.subr.mxu0 0.0
    %111 = vmatpush1.msra.mxu0 0.0
    %112 = vmatprep.subr.mxu0 0.0
    %113 = vmatpush1.msra.mxu0 0.0
    %114 = vmatprep.subr.mxu0 0.0
    %115 = vmatpush1.msra.mxu0 0.0
    %116 = vmatprep.subr.mxu0 0.0
    %117 = vmatpush1.msra.mxu0 0.0
    %118 = vmatprep.subr.mxu0 0.0
    %119 = vmatpush1.msra.mxu0 0.0
    %120 = vmatprep.subr.mxu0 0.0
    %121 = vmatpush1.msra.mxu0 0.0
    %122 = vmatprep.subr.mxu0 0.0
    %123 = vmatpush1.msra.mxu0 0.0
    %124 = vmatprep.subr.mxu0 0.0
    %125 = vmatpush1.msra.mxu0 0.0
    %126 = vmatprep.subr.mxu0 0.0
    %127 = vmatpush1.msra.mxu0 0.0
    %128 = vmatprep.subr.mxu0 0.0
    %129 = vmatpush1.msra.mxu0 0.0
    %130 = vmatprep.subr.mxu0 0.0
    %131 = vmatpush1.msra.mxu0 0.0
    %132 = vmatprep.subr.mxu0 0.0
    %133 = vmatpush1.msra.mxu0 0.0
    %134 = vmatprep.subr.mxu0 0.0
    %135 = vmatpush1.msra.mxu0 0.0
    %136 = vmatprep.subr.mxu0 0.0
    %137 = vmatpush1.msra.mxu0 0.0
    %138 = vmatprep.subr.mxu0 0.0
    %139 = vmatpush1.msra.mxu0 0.0
    %140 = vmatprep.subr.mxu0 0.0
    %141 = vmatpush1.msra.mxu0 0.0
    %142 = vmatprep.subr.mxu0 0.0
    %143 = vmatpush1.msra.mxu0 0.0
    %144 = vmatprep.subr.mxu0 0.0
    %145 = vmatpush1.msra.mxu0 0.0
    %146 = vmatprep.subr.mxu0 0.0
    %147 = vmatpush1.msra.mxu0 0.0
    %148 = vmatprep.mubr.f32.mxu0 0.0
    %149 = vmatmul.mubr.f32.gmra.mrb[0].mxu0 %v82
    %v150 = vpop.f32.mrb[0].mxu0
    %v151 = vadd.f32 %v80, %v150
    %v152 = vpop.f32.mrb[0].mxu0
    %153 = vdwg.mxu0
    %v154 = vadd.f32 %v151, %v37
    %v155 = vsel %vm45, %v154, 0.0
    %156 = vadd.xlane.f32.xlu0 %v155
    %v157 = vpop.xlane.xlu0 %156
    %v158 = vmul.f32 %v157, 0.015625
    %v159 = vsub.f32 %v154, %v158
    %v160 = vmul.f32 %v159, %v159
    %v161 = vsel %vm45, %v160, 0.0
    %162 = vadd.xlane.f32.xlu0 %v161
    %v163 = vpop.xlane.xlu0 %162
    %v164 = vmul.f32 %v163, 0.015625
    %v165 = vadd.f32 %v164, 1e-05
    %v166 = vrsqrt.pop %v165
    %v167 = vmul.f32 %v159, %v166
    %v168 = vlaneseq
    %v169 = vshrl.u32 %v168, 7
    %v170 = vsub.s32 0, %v169
    %v171 = vrot.slane %v40, %v170
    %v172 = vmul.f32 %v167, %v171
    %v173 = vlaneseq
    %v174 = vshrl.u32 %v173, 7
    %v175 = vsub.s32 0, %v174
    %v176 = vrot.slane %v41, %v175
    %v177 = vadd.f32 %v172, %v176
    %s178 = scalar_lea.vmem [#allocation2], 64
    %v179 = vld [vmem:[%s178] sm:$0xff]
    %v180 = vld [vmem:[%s178 + $0x8] sm:$0xff]
    %v181 = vld [vmem:[%s178 + $0x10] sm:$0xff]
    %v182 = vld [vmem:[%s178 + $0x18] sm:$0xff]
    %v183 = vld [vmem:[%s178 + $0x20] sm:$0xff]
    %v184 = vld [vmem:[%s178 + $0x28] sm:$0xff]
    %v185 = vld [vmem:[%s178 + $0x30] sm:$0xff]
    %v186 = vld [vmem:[%s178 + $0x38] sm:$0xff]
    %v187 = vlaneseq
    %v188 = vshrl.u32 %v187, 7
    %v189 = vsub.s32 0, %v188
    %v190 = vrot.slane %v43, %v189
    %v192 = vsel %vm45, %v177, 0
    %194 = vmatprep.subr.mxu0 0.0
    %195 = vmatpush1.msra.mxu0 %v179
    %196 = vmatprep.subr.mxu0 0.0
    %197 = vmatpush1.msra.mxu0 %v180
    %198 = vmatprep.subr.mxu0 0.0
    %199 = vmatpush1.msra.mxu0 %v181
    %200 = vmatprep.subr.mxu0 0.0
    %201 = vmatpush1.msra.mxu0 %v182
    %202 = vmatprep.subr.mxu0 0.0
    %203 = vmatpush1.msra.mxu0 %v183
    %204 = vmatprep.subr.mxu0 0.0
    %205 = vmatpush1.msra.mxu0 %v184
    %206 = vmatprep.subr.mxu0 0.0
    %207 = vmatpush1.msra.mxu0 %v185
    %208 = vmatprep.subr.mxu0 0.0
    %209 = vmatpush1.msra.mxu0 %v186
    %210 = vmatprep.subr.mxu0 0.0
    %211 = vmatpush1.msra.mxu0 0.0
    %212 = vmatprep.subr.mxu0 0.0
    %213 = vmatpush1.msra.mxu0 0.0
    %214 = vmatprep.subr.mxu0 0.0
    %215 = vmatpush1.msra.mxu0 0.0
    %216 = vmatprep.subr.mxu0 0.0
    %217 = vmatpush1.msra.mxu0 0.0
    %218 = vmatprep.subr.mxu0 0.0
    %219 = vmatpush1.msra.mxu0 0.0
    %220 = vmatprep.subr.mxu0 0.0
    %221 = vmatpush1.msra.mxu0 0.0
    %222 = vmatprep.subr.mxu0 0.0
    %223 = vmatpush1.msra.mxu0 0.0
    %224 = vmatprep.subr.mxu0 0.0
    %225 = vmatpush1.msra.mxu0 0.0
    %226 = vmatprep.subr.mxu0 0.0
    %227 = vmatpush1.msra.mxu0 0.0
    %228 = vmatprep.subr.mxu0 0.0
    %229 = vmatpush1.msra.mxu0 0.0
    %230 = vmatprep.subr.mxu0 0.0
    %231 = vmatpush1.msra.mxu0 0.0
    %232 = vmatprep.subr.mxu0 0.0
    %233 = vmatpush1.msra.mxu0 0.0
    %234 = vmatprep.subr.mxu0 0.0
    %235 = vmatpush1.msra.mxu0 0.0
    %236 = vmatprep.subr.mxu0 0.0
    %237 = vmatpush1.msra.mxu0 0.0
    %238 = vmatprep.subr.mxu0 0.0
    %239 = vmatpush1.msra.mxu0 0.0
    %240 = vmatprep.subr.mxu0 0.0
    %241 = vmatpush1.msra.mxu0 0.0
    %242 = vmatprep.subr.mxu0 0.0
    %243 = vmatpush1.msra.mxu0 0.0
    %244 = vmatprep.subr.mxu0 0.0
    %245 = vmatpush1.msra.mxu0 0.0
    %246 = vmatprep.subr.mxu0 0.0
    %247 = vmatpush1.msra.mxu0 0.0
    %248 = vmatprep.subr.mxu0 0.0
    %249 = vmatpush1.msra.mxu0 0.0
    %250 = vmatprep.subr.mxu0 0.0
    %251 = vmatpush1.msra.mxu0 0.0
    %252 = vmatprep.subr.mxu0 0.0
    %253 = vmatpush1.msra.mxu0 0.0
    %254 = vmatprep.subr.mxu0 0.0
    %255 = vmatpush1.msra.mxu0 0.0
    %256 = vmatprep.subr.mxu0 0.0
    %257 = vmatpush1.msra.mxu0 0.0
    %258 = vmatprep.mubr.f32.mxu0 0.0
    %259 = vmatmul.mubr.f32.gmra.mrb[0].mxu0 %v192
    %v260 = vpop.f32.mrb[0].mxu0
    %v261 = vadd.f32 %v190, %v260
    %v262 = vpop.f32.mrb[0].mxu0
    %263 = vdwg.mxu0
    %v264 = vmul.f32 %v261, 0.5
    %v265 = vmul.f32 %v261, 0.70710677
    %v266 = verf.f32.pop %v265
    %v267 = vadd.f32 %v266, 1.0
    %v268 = vmul.f32 %v264, %v267
    %s269 = scalar_lea.vmem [#allocation2], 128
    %v270 = vld [vmem:[%s269] sm:$0xff]
    %v271 = vld [vmem:[%s269 + $0x8] sm:$0xff]
    %v272 = vld [vmem:[%s269 + $0x10] sm:$0xff]
    %v273 = vld [vmem:[%s269 + $0x18] sm:$0xff]
    %v274 = vld [vmem:[%s269 + $0x20] sm:$0xff]
    %v275 = vld [vmem:[%s269 + $0x28] sm:$0xff]
    %v276 = vld [vmem:[%s269 + $0x30] sm:$0xff]
    %v277 = vld [vmem:[%s269 + $0x38] sm:$0xff]
    %v278 = vlaneseq
    %v279 = vshrl.u32 %v278, 7
    %v280 = vsub.s32 0, %v279
    %v281 = vrot.slane %v44, %v280
    %v283 = vsel %vm45, %v268, 0
    %285 = vmatprep.subr.mxu0 0.0
    %286 = vmatpush1.msra.mxu0 %v270
    %287 = vmatprep.subr.mxu0 0.0
    %288 = vmatpush1.msra.mxu0 %v271
    %289 = vmatprep.subr.mxu0 0.0
    %290 = vmatpush1.msra.mxu0 %v272
    %291 = vmatprep.subr.mxu0 0.0
    %292 = vmatpush1.msra.mxu0 %v273
    %293 = vmatprep.subr.mxu0 0.0
    %294 = vmatpush1.msra.mxu0 %v274
    %295 = vmatprep.subr.mxu0 0.0
    %296 = vmatpush1.msra.mxu0 %v275
    %297 = vmatprep.subr.mxu0 0.0
    %298 = vmatpush1.msra.mxu0 %v276
    %299 = vmatprep.subr.mxu0 0.0
    %300 = vmatpush1.msra.mxu0 %v277
    %301 = vmatprep.subr.mxu0 0.0
    %302 = vmatpush1.msra.mxu0 0.0
    %303 = vmatprep.subr.mxu0 0.0
    %304 = vmatpush1.msra.mxu0 0.0
    %305 = vmatprep.subr.mxu0 0.0
    %306 = vmatpush1.msra.mxu0 0.0
    %307 = vmatprep.subr.mxu0 0.0
    %308 = vmatpush1.msra.mxu0 0.0
    %309 = vmatprep.subr.mxu0 0.0
    %310 = vmatpush1.msra.mxu0 0.0
    %311 = vmatprep.subr.mxu0 0.0
    %312 = vmatpush1.msra.mxu0 0.0
    %313 = vmatprep.subr.mxu0 0.0
    %314 = vmatpush1.msra.mxu0 0.0
    %315 = vmatprep.subr.mxu0 0.0
    %316 = vmatpush1.msra.mxu0 0.0
    %317 = vmatprep.subr.mxu0 0.0
    %318 = vmatpush1.msra.mxu0 0.0
    %319 = vmatprep.subr.mxu0 0.0
    %320 = vmatpush1.msra.mxu0 0.0
    %321 = vmatprep.subr.mxu0 0.0
    %322 = vmatpush1.msra.mxu0 0.0
    %323 = vmatprep.subr.mxu0 0.0
    %324 = vmatpush1.msra.mxu0 0.0
    %325 = vmatprep.subr.mxu0 0.0
    %326 = vmatpush1.msra.mxu0 0.0
    %327 = vmatprep.subr.mxu0 0.0
    %328 = vmatpush1.msra.mxu0 0.0
    %329 = vmatprep.subr.mxu0 0.0
    %330 = vmatpush1.msra.mxu0 0.0
    %331 = vmatprep.subr.mxu0 0.0
    %332 = vmatpush1.msra.mxu0 0.0
    %333 = vmatprep.subr.mxu0 0.0
    %334 = vmatpush1.msra.mxu0 0.0
    %335 = vmatprep.subr.mxu0 0.0
    %336 = vmatpush1.msra.mxu0 0.0
    %337 = vmatprep.subr.mxu0 0.0
    %338 = vmatpush1.msra.mxu0 0.0
    %339 = vmatprep.subr.mxu0 0.0
    %340 = vmatpush1.msra.mxu0 0.0
    %341 = vmatprep.subr.mxu0 0.0
    %342 = vmatpush1.msra.mxu0 0.0
    %343 = vmatprep.subr.mxu0 0.0
    %344 = vmatpush1.msra.mxu0 0.0
    %345 = vmatprep.subr.mxu0 0.0
    %346 = vmatpush1.msra.mxu0 0.0
    %347 = vmatprep.subr.mxu0 0.0
    %348 = vmatpush1.msra.mxu0 0.0
    %349 = vmatprep.mubr.f32.mxu0 0.0
    %350 = vmatmul.mubr.f32.gmra.mrb[0].mxu0 %v283
    %v351 = vpop.f32.mrb[0].mxu0
    %v352 = vadd.f32 %v281, %v351
    %v353 = vpop.f32.mrb[0].mxu0
    %354 = vdwg.mxu0
    %v355 = vadd.f32 %v177, %v352
    %v356 = vld [vmem:[%s1] sm:$0xff]
    %v357 = vld [vmem:[%s4] sm:$0x1]
    %v358 = vld [vmem:[%s4 + $0x1] sm:$0x1]
    %v359 = vld [vmem:[%s4 + $0x2] sm:$0x1]
    %v360 = vld [vmem:[%s4 + $0x3] sm:$0x1]
    %v361 = vld [vmem:[%s4 + $0x4] sm:$0x1]
    %v362 = vld [vmem:[%s4 + $0x5] sm:$0x1]
    %v363 = vld [vmem:[%s4 + $0x6] sm:$0x1]
    %vm364 = vcmask 261120
    %v365 = vsel %vm364, %v356, 0.0
    %366 = vadd.xlane.f32.xlu0 %v365
    %v367 = vpop.xlane.xlu0 %366
    %v368 = vmul.f32 %v367, 0.03125
    %v369 = vsub.f32 %v356, %v368
    %v370 = vmul.f32 %v369, %v369
    %v371 = vsel %vm364, %v370, 0.0
    %372 = vadd.xlane.f32.xlu0 %v371
    %v373 = vpop.xlane.xlu0 %372
    %v374 = vmul.f32 %v373, 0.03125
    %v375 = vadd.f32 %v374, 1e-05
    %v376 = vrsqrt.pop %v375
    %v377 = vmul.f32 %v369, %v376
    %v378 = vlaneseq
    %v379 = vshrl.u32 %v378, 7
    %v380 = vsub.s32 0, %v379
    %v381 = vrot.slane %v357, %v380
    %v382 = vmul.f32 %v377, %v381
    %v383 = vlaneseq
    %v384 = vshrl.u32 %v383, 7
    %v385 = vsub.s32 0, %v384
    %v386 = vrot.slane %v358, %v385
    %v387 = vadd.f32 %v382, %v386
    %v388 = vld [vmem:[%s5] sm:$0xff]
    %v389 = vld [vmem:[%s5 + $0x8] sm:$0xff]
    %v390 = vld [vmem:[%s5 + $0x10] sm:$0xff]
    %v391 = vld [vmem:[%s5 + $0x18] sm:$0xff]
    %v392 = vlaneseq
    %v393 = vshrl.u32 %v392, 7
    %v394 = vsub.s32 0, %v393
    %v395 = vrot.slane %v361, %v394
    %v397 = vsel %vm364, %v387, 0
    %399 = vmatprep.subr.mxu0 0.0
    %400 = vmatpush1.msra.mxu0 %v388
    %401 = vmatprep.subr.mxu0 0.0
    %402 = vmatpush1.msra.mxu0 %v389
    %403 = vmatprep.subr.mxu0 0.0
    %404 = vmatpush1.msra.mxu0 %v390
    %405 = vmatprep.subr.mxu0 0.0
    %406 = vmatpush1.msra.mxu0 %v391
    %407 = vmatprep.subr.mxu0 0.0
    %408 = vmatpush1.msra.mxu0 0.0
    %409 = vmatprep.subr.mxu0 0.0
    %410 = vmatpush1.msra.mxu0 0.0
    %411 = vmatprep.subr.mxu0 0.0
    %412 = vmatpush1.msra.mxu0 0.0
    %413 = vmatprep.subr.mxu0 0.0
    %414 = vmatpush1.msra.mxu0 0.0
    %415 = vmatprep.subr.mxu0 0.0
    %416 = vmatpush1.msra.mxu0 0.0
    %417 = vmatprep.subr.mxu0 0.0
    %418 = vmatpush1.msra.mxu0 0.0
    %419 = vmatprep.subr.mxu0 0.0
    %420 = vmatpush1.msra.mxu0 0.0
    %421 = vmatprep.subr.mxu0 0.0
    %422 = vmatpush1.msra.mxu0 0.0
    %423 = vmatprep.subr.mxu0 0.0
    %424 = vmatpush1.msra.mxu0 0.0
    %425 = vmatprep.subr.mxu0 0.0
    %426 = vmatpush1.msra.mxu0 0.0
    %427 = vmatprep.subr.mxu0 0.0
    %428 = vmatpush1.msra.mxu0 0.0
    %429 = vmatprep.subr.mxu0 0.0
    %430 = vmatpush1.msra.mxu0 0.0
    %431 = vmatprep.subr.mxu0 0.0
    %432 = vmatpush1.msra.mxu0 0.0
    %433 = vmatprep.subr.mxu0 0.0
    %434 = vmatpush1.msra.mxu0 0.0
    %435 = vmatprep.subr.mxu0 0.0
    %436 = vmatpush1.msra.mxu0 0.0
    %437 = vmatprep.subr.mxu0 0.0
    %438 = vmatpush1.msra.mxu0 0.0
    %439 = vmatprep.subr.mxu0 0.0
    %440 = vmatpush1.msra.mxu0 0.0
    %441 = vmatprep.subr.mxu0 0.0
    %442 = vmatpush1.msra.mxu0 0.0
    %443 = vmatprep.subr.mxu0 0.0
    %444 = vmatpush1.msra.mxu0 0.0
    %445 = vmatprep.subr.mxu0 0.0
    %446 = vmatpush1.msra.mxu0 0.0
    %447 = vmatprep.subr.mxu0 0.0
    %448 = vmatpush1.msra.mxu0 0.0
    %449 = vmatprep.subr.mxu0 0.0
    %450 = vmatpush1.msra.mxu0 0.0
    %451 = vmatprep.subr.mxu0 0.0
    %452 = vmatpush1.msra.mxu0 0.0
    %453 = vmatprep.subr.mxu0 0.0
    %454 = vmatpush1.msra.mxu0 0.0
    %455 = vmatprep.subr.mxu0 0.0
    %456 = vmatpush1.msra.mxu0 0.0
    %457 = vmatprep.subr.mxu0 0.0
    %458 = vmatpush1.msra.mxu0 0.0
    %459 = vmatprep.subr.mxu0 0.0
    %460 = vmatpush1.msra.mxu0 0.0
    %461 = vmatprep.subr.mxu0 0.0
    %462 = vmatpush1.msra.mxu0 0.0
    %463 = vmatprep.mubr.f32.mxu0 0.0
    %464 = vmatmul.mubr.f32.gmra.mrb[0].mxu0 %v397
    %v465 = vpop.f32.mrb[0].mxu0
    %v466 = vadd.f32 %v395, %v465
    %v467 = vpop.f32.mrb[0].mxu0
    %468 = vdwg.mxu0
    %v469 = vadd.f32 %v466, %v356
    %v470 = vsel %vm364, %v469, 0.0
    %471 = vadd.xlane.f32.xlu0 %v470
    %v472 = vpop.xlane.xlu0 %471
    %v473 = vmul.f32 %v472, 0.03125
    %v474 = vsub.f32 %v469, %v473
    %v475 = vmul.f32 %v474, %v474
    %v476 = vsel %vm364, %v475, 0.0
    %477 = vadd.xlane.f32.xlu0 %v476
    %v478 = vpop.xlane.xlu0 %477
    %v479 = vmul.f32 %v478, 0.03125
    %v480 = vadd.f32 %v479, 1e-05
    %v481 = vrsqrt.pop %v480
    %v482 = vmul.f32 %v474, %v481
    %v483 = vlaneseq
    %v484 = vshrl.u32 %v483, 7
    %v485 = vsub.s32 0, %v484
    %v486 = vrot.slane %v359, %v485
    %v487 = vmul.f32 %v482, %v486
    %v488 = vlaneseq
    %v489 = vshrl.u32 %v488, 7
    %v490 = vsub.s32 0, %v489
    %v491 = vrot.slane %v360, %v490
    %v492 = vadd.f32 %v487, %v491
    %s493 = scalar_lea.vmem %s5, 32
    %v494 = vld [vmem:[%s493] sm:$0xff]
    %v495 = vld [vmem:[%s493 + $0x8] sm:$0xff]
    %v496 = vld [vmem:[%s493 + $0x10] sm:$0xff]
    %v497 = vld [vmem:[%s493 + $0x18] sm:$0xff]
    %v498 = vlaneseq
    %v499 = vshrl.u32 %v498, 7
    %v500 = vsub.s32 0, %v499
    %v501 = vrot.slane %v362, %v500
    %v503 = vsel %vm364, %v492, 0
    %505 = vmatprep.subr.mxu0 0.0
    %506 = vmatpush1.msra.mxu0 %v494
    %507 = vmatprep.subr.mxu0 0.0
    %508 = vmatpush1.msra.mxu0 %v495
    %509 = vmatprep.subr.mxu0 0.0
    %510 = vmatpush1.msra.mxu0 %v496
    %511 = vmatprep.subr.mxu0 0.0
    %512 = vmatpush1.msra.mxu0 %v497
    %513 = vmatprep.subr.mxu0 0.0
    %514 = vmatpush1.msra.mxu0 0.0
    %515 = vmatprep.subr.mxu0 0.0
    %516 = vmatpush1.msra.mxu0 0.0
    %517 = vmatprep.subr.mxu0 0.0
    %518 = vmatpush1.msra.mxu0 0.0
    %519 = vmatprep.subr.mxu0 0.0
    %520 = vmatpush1.msra.mxu0 0.0
    %521 = vmatprep.subr.mxu0 0.0
    %522 = vmatpush1.msra.mxu0 0.0
    %523 = vmatprep.subr.mxu0 0.0
    %524 = vmatpush1.msra.mxu0 0.0
    %525 = vmatprep.subr.mxu0 0.0
    %526 = vmatpush1.msra.mxu0 0.0
    %527 = vmatprep.subr.mxu0 0.0
    %528 = vmatpush1.msra.mxu0 0.0
    %529 = vmatprep.subr.mxu0 0.0
    %530 = vmatpush1.msra.mxu0 0.0
    %531 = vmatprep.subr.mxu0 0.0
    %532 = vmatpush1.msra.mxu0 0.0
    %533 = vmatprep.subr.mxu0 0.0
    %534 = vmatpush1.msra.mxu0 0.0
    %535 = vmatprep.subr.mxu0 0.0
    %536 = vmatpush1.msra.mxu0 0.0
    %537 = vmatprep.subr.mxu0 0.0
    %538 = vmatpush1.msra.mxu0 0.0
    %539 = vmatprep.subr.mxu0 0.0
    %540 = vmatpush1.msra.mxu0 0.0
    %541 = vmatprep.subr.mxu0 0.0
    %542 = vmatpush1.msra.mxu0 0.0
    %543 = vmatprep.subr.mxu0 0.0
    %544 = vmatpush1.msra.mxu0 0.0
    %545 = vmatprep.subr.mxu0 0.0
    %546 = vmatpush1.msra.mxu0 0.0
    %547 = vmatprep.subr.mxu0 0.0
    %548 = vmatpush1.msra.mxu0 0.0
    %549 = vmatprep.subr.mxu0 0.0
    %550 = vmatpush1.msra.mxu0 0.0
    %551 = vmatprep.subr.mxu0 0.0
    %552 = vmatpush1.msra.mxu0 0.0
    %553 = vmatprep.subr.mxu0 0.0
    %554 = vmatpush1.msra.mxu0 0.0
    %555 = vmatprep.subr.mxu0 0.0
    %556 = vmatpush1.msra.mxu0 0.0
    %557 = vmatprep.subr.mxu0 0.0
    %558 = vmatpush1.msra.mxu0 0.0
    %559 = vmatprep.subr.mxu0 0.0
    %560 = vmatpush1.msra.mxu0 0.0
    %561 = vmatprep.subr.mxu0 0.0
    %562 = vmatpush1.msra.mxu0 0.0
    %563 = vmatprep.subr.mxu0 0.0
    %564 = vmatpush1.msra.mxu0 0.0
    %565 = vmatprep.subr.mxu0 0.0
    %566 = vmatpush1.msra.mxu0 0.0
    %567 = vmatprep.subr.mxu0 0.0
    %568 = vmatpush1.msra.mxu0 0.0
    %569 = vmatprep.mubr.f32.mxu0 0.0
    %570 = vmatmul.mubr.f32.gmra.mrb[0].mxu0 %v503
    %v571 = vpop.f32.mrb[0].mxu0
    %v572 = vadd.f32 %v501, %v571
    %v573 = vpop.f32.mrb[0].mxu0
    %574 = vdwg.mxu0
    %v575 = vmul.f32 %v572, 0.5
    %v576 = vmul.f32 %v572, 0.70710677
    %v577 = verf.f32.pop %v576
    %v578 = vadd.f32 %v577, 1.0
    %v579 = vmul.f32 %v575, %v578
    %s580 = scalar_lea.vmem %s5, 64
    %v581 = vld [vmem:[%s580] sm:$0xff]
    %v582 = vld [vmem:[%s580 + $0x8] sm:$0xff]
    %v583 = vld [vmem:[%s580 + $0x10] sm:$0xff]
    %v584 = vld [vmem:[%s580 + $0x18] sm:$0xff]
    %v585 = vlaneseq
    %v586 = vshrl.u32 %v585, 7
    %v587 = vsub.s32 0, %v586
    %v588 = vrot.slane %v363, %v587
    %v590 = vsel %vm364, %v579, 0
    %592 = vmatprep.subr.mxu0 0.0
    %593 = vmatpush1.msra.mxu0 %v581
    %594 = vmatprep.subr.mxu0 0.0
    %595 = vmatpush1.msra.mxu0 %v582
    %596 = vmatprep.subr.mxu0 0.0
    %597 = vmatpush1.msra.mxu0 %v583
    %598 = vmatprep.subr.mxu0 0.0
    %599 = vmatpush1.msra.mxu0 %v584
    %600 = vmatprep.subr.mxu0 0.0
    %601 = vmatpush1.msra.mxu0 0.0
    %602 = vmatprep.subr.mxu0 0.0
    %603 = vmatpush1.msra.mxu0 0.0
    %604 = vmatprep.subr.mxu0 0.0
    %605 = vmatpush1.msra.mxu0 0.0
    %606 = vmatprep.subr.mxu0 0.0
    %607 = vmatpush1.msra.mxu0 0.0
    %608 = vmatprep.subr.mxu0 0.0
    %609 = vmatpush1.msra.mxu0 0.0
    %610 = vmatprep.subr.mxu0 0.0
    %611 = vmatpush1.msra.mxu0 0.0
    %612 = vmatprep.subr.mxu0 0.0
    %613 = vmatpush1.msra.mxu0 0.0
    %614 = vmatprep.subr.mxu0 0.0
    %615 = vmatpush1.msra.mxu0 0.0
    %616 = vmatprep.subr.mxu0 0.0
    %617 = vmatpush1.msra.mxu0 0.0
    %618 = vmatprep.subr.mxu0 0.0
    %619 = vmatpush1.msra.mxu0 0.0
    %620 = vmatprep.subr.mxu0 0.0
    %621 = vmatpush1.msra.mxu0 0.0
    %622 = vmatprep.subr.mxu0 0.0
    %623 = vmatpush1.msra.mxu0 0.0
    %624 = vmatprep.subr.mxu0 0.0
    %625 = vmatpush1.msra.mxu0 0.0
    %626 = vmatprep.subr.mxu0 0.0
    %627 = vmatpush1.msra.mxu0 0.0
    %628 = vmatprep.subr.mxu0 0.0
    %629 = vmatpush1.msra.mxu0 0.0
    %630 = vmatprep.subr.mxu0 0.0
    %631 = vmatpush1.msra.mxu0 0.0
    %632 = vmatprep.subr.mxu0 0.0
    %633 = vmatpush1.msra.mxu0 0.0
    %634 = vmatprep.subr.mxu0 0.0
    %635 = vmatpush1.msra.mxu0 0.0
    %636 = vmatprep.subr.mxu0 0.0
    %637 = vmatpush1.msra.mxu0 0.0
    %638 = vmatprep.subr.mxu0 0.0
    %639 = vmatpush1.msra.mxu0 0.0
    %640 = vmatprep.subr.mxu0 0.0
    %641 = vmatpush1.msra.mxu0 0.0
    %642 = vmatprep.subr.mxu0 0.0
    %643 = vmatpush1.msra.mxu0 0.0
    %644 = vmatprep.subr.mxu0 0.0
    %645 = vmatpush1.msra.mxu0 0.0
    %646 = vmatprep.subr.mxu0 0.0
    %647 = vmatpush1.msra.mxu0 0.0
    %648 = vmatprep.subr.mxu0 0.0
    %649 = vmatpush1.msra.mxu0 0.0
    %650 = vmatprep.subr.mxu0 0.0
    %651 = vmatpush1.msra.mxu0 0.0
    %652 = vmatprep.subr.mxu0 0.0
    %653 = vmatpush1.msra.mxu0 0.0
    %654 = vmatprep.subr.mxu0 0.0
    %655 = vmatpush1.msra.mxu0 0.0
    %656 = vmatprep.mubr.f32.mxu0 0.0
    %657 = vmatmul.mubr.f32.gmra.mrb[0].mxu0 %v590
    %v658 = vpop.f32.mrb[0].mxu0
    %v659 = vadd.f32 %v588, %v658
    %v660 = vpop.f32.mrb[0].mxu0
    %661 = vdwg.mxu0
    %v662 = vadd.f32 %v492, %v659
    %664 = vrot.lane.b32.xlu0 %v355, 64
    %v665 = vpop.permute.xlu0 %664
    %v667 = vsel %vm45, %v37, %v665
    %668 = vst [vmem:[%s6] sm:$0xff] %v667
    %669 = vst.msk [vmem:[%s6 + $0x8] sm:$0xff] %vm364, %v662
    // Predicated region
    $region30: #{mult_time_2d_mixer_pallas.1} parent=1 // pred_check
      _
    $region31: #{mult_time_2d_mixer_pallas.1} parent=1 // pred_check_branch
      %671 = sbr.rel (0) target = $region33
    $region32: #{mult_time_2d_mixer_pallas.1} parent=1 // pred_region
      _
    $region33: #{mult_time_2d_mixer_pallas.1} parent=1 // pred_fallthru
      _
    // Predicated region
    $region34: #{mult_time_2d_mixer_pallas.1} parent=1 // pred_check
      _
    $region35: #{mult_time_2d_mixer_pallas.1} parent=1 // pred_check_branch
      %673 = sbr.rel (0) target = $region37
    $region36: #{mult_time_2d_mixer_pallas.1} parent=1 // pred_region
      _
    $region37: #{mult_time_2d_mixer_pallas.1} parent=1 // pred_fallthru
      _
    %674 = vsyncpa [#allocation3], 1

</llo_original>
